<compile_context>
chip_gen: v5e
topology: v5e:2x2
jax: 0.10.0
libtpu: 0.0.40
codegen_flags: <defaults>
</compile_context>

<pallas_src>
from functools import partial

import jax
import jax.numpy as jnp
from jax.experimental import pallas as pl
from jax.experimental.pallas import tpu as pltpu

LANE = 128
SUB = 8


def bce_onehot_kernel(logits_ref, targets_ref, out_ref, *, rows_valid, has_tail):
    """One grid step handles a (C, row_tile, 128) probability slab and a
    (1, row_tile, 128) int8 label slab for a single batch element n, reduces the
    (negated) BCE contributions to one scalar and writes it to its own output
    block.  Negation and the 1/M scale are applied on the host."""
    j = pl.program_id(1)

    p = logits_ref[...].astype(jnp.float32)        # (C, RT, 128) probabilities
    t = targets_ref[...].astype(jnp.int32)         # (1, RT, 128) labels (or -1 pad)

    ch = jax.lax.broadcasted_iota(jnp.int32, p.shape, 0)   # channel index per plane
    onehot = ch == t                                       # broadcast over C (outer dim)

    # nn.BCELoss elementwise with PyTorch's log clamp at -100, written with a
    # single log push to the EUP.  Sign is folded into the host-side finalize.
    q = jnp.where(onehot, p, 1.0 - p)
    contrib = jnp.maximum(jnp.log(q), -100.0)

    def reduce_and_write(c):
        # VPU vreg-add tree to one (8,128) vreg, then a single tiny XLU reduce.
        part = c.reshape(-1, SUB, LANE).sum(axis=0)
        out_ref[...] = jnp.full(out_ref.shape, jnp.sum(part))

    if has_tail:
        last = pl.num_programs(1) - 1

        @pl.when(j < last)
        def _steady():
            reduce_and_write(contrib)

        @pl.when(j == last)
        def _tail():
            # Only the last row-block reads past ROWS; mask those rows (the
            # select also kills any NaN/Inf from logs of out-of-bounds garbage).
            rt = p.shape[1]
            row = jax.lax.broadcasted_iota(jnp.int32, p.shape, 1) + j * rt
            reduce_and_write(jnp.where(row < rows_valid, contrib, 0.0))
    else:
        reduce_and_write(contrib)


def cross_entropy_loss(logits, targets, labels, ignore_index=None, row_tile=1024):
    """logits: (N, C, D, H, W) probabilities in (0, 1); targets: (N, D, H, W) int."""
    N, C, D, H, W = logits.shape
    assert C == len(labels)
    DHW = D * H * W
    M = N * DHW

    # to_one_hot: label 4 -> 3; remap on host (targets are tiny) and pack to int8.
    logits_r = logits.reshape(N, C, DHW)
    targets_r = jnp.where(targets == 4, 3, targets).astype(jnp.int8).reshape(N, 1, DHW)

    # Pad the spatial axis to a multiple of 8*128 so the (ROWS, 128) layout is
    # dense.  Padding values are chosen so padded elements contribute exactly 0
    # to the loss (p = 0, t = -1  ->  onehot false, log(1 - 0) = 0), so no
    # per-step masking is needed for them.  If DHW is already aligned this is a
    # free reshape (no copy).
    DHW_pad = pl.cdiv(DHW, SUB * LANE) * (SUB * LANE)
    pad = DHW_pad - DHW
    if pad:
        logits_r = jnp.pad(logits_r, ((0, 0), (0, 0), (0, pad)))
        targets_r = jnp.pad(targets_r, ((0, 0), (0, 0), (0, pad)), constant_values=-1)
    ROWS = DHW_pad // LANE                              # multiple of 8
    logits_r = logits_r.reshape(N, C, ROWS, LANE)
    targets_r = targets_r.reshape(N, 1, ROWS, LANE)

    # Row tile: multiple of 8, capped at ROWS.  Default 1024 rows -> 2 MiB f32
    # logits block for C=4: per-step DMA (~1.5-3 us) >> ~0.35 us step overhead.
    row_tile = max(SUB, (min(row_tile, ROWS) // SUB) * SUB)
    grid_j = pl.cdiv(ROWS, row_tile)
    has_tail = (ROWS % row_tile) != 0

    # TODO(synk): ignore_index channel masking not implemented (module default is
    # None; the reference's `if not self.ignore_index` guard makes index 0 a no-op
    # anyway).

    partials = pl.pallas_call(
        partial(bce_onehot_kernel, rows_valid=ROWS, has_tail=has_tail),
        out_shape=jax.ShapeDtypeStruct((N, grid_j, SUB, LANE), jnp.float32),
        grid_spec=pltpu.PrefetchScalarGridSpec(
            num_scalar_prefetch=0,
            grid=(N, grid_j),
            in_specs=[
                pl.BlockSpec((None, C, row_tile, LANE), lambda n, j: (n, 0, j, 0)),
                pl.BlockSpec((None, 1, row_tile, LANE), lambda n, j: (n, 0, j, 0)),
            ],
            out_specs=pl.BlockSpec((None, 1, SUB, LANE), lambda n, j: (n, j, 0, 0)),
        ),
        compiler_params=pltpu.CompilerParams(
            # Every (n, j) block is independent work -> both axes parallel
            # (keeps both v7x TensorCores busy even when N == 1).
            dimension_semantics=("parallel", "parallel"),
            vmem_limit_bytes=32 * 1024 * 1024,
        ),
    )(logits_r, targets_r)

    # sum_c mean_{n,d,h,w} BCE  ==  -(sum of all contributions) / (N*D*H*W).
    return -jnp.sum(partials[:, :, 0, 0]) / M


def _reference_loss(logits, targets):
    """Pure-JAX mirror of the PyTorch forward (for a sanity check)."""
    C = logits.shape[1]
    t = jnp.where(targets == 4, 3, targets)
    onehot = jax.nn.one_hot(t, C, axis=1, dtype=jnp.float32)       # (N,C,D,H,W)
    log_p = jnp.maximum(jnp.log(logits), -100.0)
    log_1p = jnp.maximum(jnp.log(1.0 - logits), -100.0)
    bce = -(onehot * log_p + (1.0 - onehot) * log_1p)
    return jnp.sum(jnp.mean(bce, axis=(0, 2, 3, 4)))               # sum of per-channel means


if __name__ == "__main__":
    labels = [0, 1, 2, 3]                 # 4 classes (config['PARAMETERS']['labels'])
    key = jax.random.PRNGKey(0)
    k_logits, k_targets, k_logits2, k_targets2 = jax.random.split(key, 4)

    # Case 1: small, unaligned spatial extent (DHW=384 -> exercises host padding,
    # single row-block per batch element).
    N, C, D, H, W = 2, len(labels), 4, 8, 12
    logits = jax.nn.sigmoid(
        jax.random.normal(k_logits, (N, C, D, H, W), dtype=jnp.float32))
    targets = jax.random.randint(k_targets, (N, D, H, W), 0, 5, dtype=jnp.int32)

    ref = jax.block_until_ready(_reference_loss(logits, targets))
    out = jax.block_until_ready(cross_entropy_loss(logits, targets, labels))
    assert jnp.allclose(out, ref, rtol=1e-5, atol=1e-5), (out, ref)

    # Case 2: aligned spatial extent (DHW=3072, ROWS=24, no padding).
    D2, H2, W2 = 4, 8, 96
    logits2 = jax.nn.sigmoid(
        jax.random.normal(k_logits2, (N, C, D2, H2, W2), dtype=jnp.float32))
    targets2 = jax.random.randint(k_targets2, (N, D2, H2, W2), 0, 5, dtype=jnp.int32)

    ref2 = jax.block_until_ready(_reference_loss(logits2, targets2))
    out2 = jax.block_until_ready(cross_entropy_loss(logits2, targets2, labels))
    assert jnp.allclose(out2, ref2, rtol=1e-5, atol=1e-5), (out2, ref2)

    # Case 2 with a small row_tile: multi-step grid with a partial (masked) last
    # row-block (ROWS=24, row_tile=16 -> grid_j=2, tail of 8 OOB rows).
    out2_t = jax.block_until_ready(
        cross_entropy_loss(logits2, targets2, labels, row_tile=16))
    assert jnp.allclose(out2_t, ref2, rtol=1e-5, atol=1e-5), (out2_t, ref2)

    print("KERNEL_OK")
</pallas_src>

<mosaic_0001>
module attributes {stable_mosaic.version = 11 : i64} {
  func.func @bce_onehot_kernel(%arg0: i32, %arg1: i32, %arg2: memref<1x4x8x128xf32, #tpu.memory_space<vmem>>, %arg3: memref<1x1x8x128xi8, #tpu.memory_space<vmem>>, %arg4: memref<1x1x8x128xf32, #tpu.memory_space<vmem>>) attributes {dimension_semantics = [#tpu.dimension_semantics<parallel>, #tpu.dimension_semantics<parallel>], iteration_bounds = array<i64: 2, 1>, scalar_prefetch = 0 : i64, scratch_operands = 0 : i64, tpu.core_type = #tpu.core_type<tc>, window_params = [{transform_indices = @transform_0, window_bounds = array<i64: 1, 4, 8, 128>}, {transform_indices = @transform_1, window_bounds = array<i64: 1, 1, 8, 128>}, {transform_indices = @transform_2, window_bounds = array<i64: 1, 1, 8, 128>}]} {
    %c0 = arith.constant 0 : index
    %c0_0 = arith.constant 0 : index
    %c0_1 = arith.constant 0 : index
    %c0_2 = arith.constant 0 : index
    %0 = vector.load %arg2[%c0, %c0_0, %c0_1, %c0_2] : memref<1x4x8x128xf32, #tpu.memory_space<vmem>>, vector<1x4x8x128xf32>
    %1 = vector.shape_cast %0 : vector<1x4x8x128xf32> to vector<4x8x128xf32>
    %c0_3 = arith.constant 0 : index
    %c0_4 = arith.constant 0 : index
    %c0_5 = arith.constant 0 : index
    %c0_6 = arith.constant 0 : index
    %2 = vector.load %arg3[%c0_3, %c0_4, %c0_5, %c0_6] : memref<1x1x8x128xi8, #tpu.memory_space<vmem>>, vector<1x1x8x128xi8>
    %3 = vector.shape_cast %2 : vector<1x1x8x128xi8> to vector<1x8x128xi8>
    %4 = arith.extsi %3 : vector<1x8x128xi8> to vector<1x8x128xi32>
    %5 = tpu.iota {dimensions = array<i32: 0>} : vector<4x8x128xi32>
    %6 = vector.broadcast %4 : vector<1x8x128xi32> to vector<4x8x128xi32>
    %7 = arith.cmpi eq, %5, %6 : vector<4x8x128xi32>
    %cst = arith.constant 1.000000e+00 : f32
    %8 = vector.broadcast %cst : f32 to vector<4x8x128xf32>
    %9 = arith.subf %8, %1 : vector<4x8x128xf32>
    %10 = arith.select %7, %1, %9 : vector<4x8x128xi1>, vector<4x8x128xf32>
    %11 = math.log %10 : vector<4x8x128xf32>
    %cst_7 = arith.constant -1.000000e+02 : f32
    %12 = vector.broadcast %cst_7 : f32 to vector<4x8x128xf32>
    %13 = arith.maximumf %11, %12 : vector<4x8x128xf32>
    %cst_8 = arith.constant dense<0.000000e+00> : vector<8x128xf32>
    %14 = vector.multi_reduction <add>, %13, %cst_8 [0] : vector<4x8x128xf32> to vector<8x128xf32>
    %15 = vector.shape_cast %14 : vector<8x128xf32> to vector<1x8x128xf32>
    %cst_9 = arith.constant dense<0.000000e+00> : vector<1xf32>
    %16 = vector.multi_reduction <add>, %15, %cst_9 [1, 2] : vector<1x8x128xf32> to vector<1xf32>
    %17 = vector.shape_cast %16 : vector<1xf32> to vector<1x1x1xf32>
    %18 = vector.extract %17[0, 0, 0] : f32 from vector<1x1x1xf32>
    %19 = vector.broadcast %18 : f32 to vector<1x8x128xf32>
    %c0_10 = arith.constant 0 : index
    %c0_11 = arith.constant 0 : index
    %c0_12 = arith.constant 0 : index
    %c0_13 = arith.constant 0 : index
    %20 = vector.load %arg4[%c0_10, %c0_11, %c0_12, %c0_13] : memref<1x1x8x128xf32, #tpu.memory_space<vmem>>, vector<1x1x8x128xf32>
    %21 = vector.shape_cast %20 : vector<1x1x8x128xf32> to vector<1x8x128xf32>
    %22 = vector.shape_cast %19 : vector<1x8x128xf32> to vector<1x1x8x128xf32>
    tpu.vector_store %arg4[%c0_10, %c0_11, %c0_12, %c0_13], %22 {strides = array<i32>} : memref<1x1x8x128xf32, #tpu.memory_space<vmem>>, vector<1x1x8x128xf32>,
    return
  }
  func.func @transform_0(%arg0: i32, %arg1: i32) -> (i32, i32, i32, i32) {
    %c0_i32 = arith.constant 0 : i32
    %c0_i32_0 = arith.constant 0 : i32
    %c0_i32_1 = arith.constant 0 : i32
    return %arg0, %c0_i32, %arg1, %c0_i32_0 : i32, i32, i32, i32
  }
  func.func @transform_1(%arg0: i32, %arg1: i32) -> (i32, i32, i32, i32) {
    %c0_i32 = arith.constant 0 : i32
    %c0_i32_0 = arith.constant 0 : i32
    %c0_i32_1 = arith.constant 0 : i32
    return %arg0, %c0_i32, %arg1, %c0_i32_0 : i32, i32, i32, i32
  }
  func.func @transform_2(%arg0: i32, %arg1: i32) -> (i32, i32, i32, i32) {
    %c0_i32 = arith.constant 0 : i32
    %c0_i32_0 = arith.constant 0 : i32
    %c0_i32_1 = arith.constant 0 : i32
    return %arg0, %arg1, %c0_i32, %c0_i32_0 : i32, i32, i32, i32
  }
}

</mosaic_0001>

<llo_original>
// kernel: tpu_custom_call.1
$region0: #{tpu_custom_call.1}
  #allocation0 [shape = 'u32[]', space=smem, size = 0x4, offset = 0x4, fixed_abs, tag = 'smem constant byte address 0x4 - core index']
  #allocation1 [shape = 'u32[72,128]{1,0:T(1,128)}', space=vmem, size = 0x9000, scoped, tag = 'internal scratch']
  %s0 = inlined_call_operand.hbm [shape: f32[2,4,8,128], index: 0, kind: input, shape index: {}]
  %s1 = inlined_call_operand.hbm [shape: s8[2,1,8,128], index: 1, kind: input, shape index: {}]
  %s2 = inlined_call_operand.hbm [shape: f32[2,1,8,128], index: 2, kind: output, shape index: {}]
  %s3 = sld [smem:[#allocation0]]
  $region49: #{tpu_custom_call.1} parent=0
    _
  %s5 = ssub.s32 1, %s3
  %s6 = scalar_select 0, %s5, %s3
  $region1: #{tpu_custom_call.1} parent=0
    #allocation2 [shape = 'u8[32768]{0}', space=vmem, size = 0x8000, scoped, tag = 'input window, operand 0']
    #allocation3 [shape = 's32[2]{0}', space=sflag, size = 0x8, scoped, tag = 'scoped memory for tpu_custom_call.1']
    #allocation4 [shape = 's32[2]{0}', space=sflag, size = 0x8, scoped, tag = 'scoped memory for tpu_custom_call.1']
    #allocation5 [shape = 'u8[2048]{0}', space=vmem, size = 0x800, scoped, tag = 'input window, operand 1']
    #allocation6 [shape = 's32[2]{0}', space=sflag, size = 0x8, scoped, tag = 'scoped memory for tpu_custom_call.1']
    #allocation7 [shape = 'u8[8192]{0}', space=vmem, size = 0x2000, scoped, tag = 'output window, operand 0']
    %7 = vsyncpa [#allocation3], 0
    %s8 = scalar_lea.sflag [#allocation3], 1
    %9 = vsyncpa %s8, 0
    %10 = vsyncpa [#allocation6], 0
    %s11 = scalar_lea.sflag [#allocation6], 1
    %12 = vsyncpa %s11, 0
    %13 = vsyncpa [#allocation4], 0
    %s14 = scalar_lea.sflag [#allocation4], 1
    %15 = vsyncpa %s14, 0
    loop: start=0, step=1, limit=4
    $region2: #{tpu_custom_call.1} parent=1 // loop_pre_header
      _
    $region3: #{tpu_custom_call.1} parent=1 // loop_header
      %s17 = sphi 0, %s21
      %p18 = scmp.ge.s32.totalorder %s17, 4
      %s24 = sphi 0, %s36
      %s25 = sphi 0, %s32
      %s26 = sphi 0, %s24
      %s27 = sphi 0, %s25
      %s28 = sphi 0, %s26
      %s29 = sphi 0, %s27
      %s41 = sphi 0, %s43
      %s44 = sphi 0, %s41
      %s45 = sphi 0, %s44
      %s61 = sphi 0, %s45
      %s69 = sphi 0, %s71
      %s72 = sphi 0, %s69
      %s73 = sphi 0, %s72
      %s89 = sphi 0, %s73
      %s97 = sphi 0, %s99
      %s100 = sphi 0, %s97
      %s101 = sphi 0, %s100
      %s117 = sphi 0, %s101
    $region4: #{tpu_custom_call.1} parent=1 // loop_header_branch
      %20 = sbr.rel (%p18) target = $region8
    $region5: #{tpu_custom_call.1} parent=1 // loop_body
      %s22 = ssub.s32 %s17, 1
      %s23 = ssub.s32 %s17, 2
      %s30 = sadd.s32 1, %s25
      %p31 = scmp.ge.s32.totalorder %s30, 1
      %s32 = scalar_select %p31, 0, %s30
      %s33 = sadd.s32 1, %s24
      %s34 = scalar_select %p31, %s33, %s24
      %p35 = scmp.ge.s32.totalorder %s34, 2
      %s36 = scalar_select %p35, 0, %s34
      %s37 = ssub.s32 %s24, %s36
      %s38 = ssub.s32 %s25, %s32
      %s39 = sor.u32 %s37, %s38
      %p40 = scmp.eq.s32.totalorder %s39, 0
      %s42 = sadd.s32 %s41, 1
      %s43 = scalar_select %p40, %s41, %s42
      %p46 = pneg %p40
      %p47 = scmp.eq.s32.totalorder %s17, 1
      %p48 = por %p46, %p47
      %p49 = scmp.ne.s32.totalorder %s41, %s44
      %p50 = scmp.eq.s32.totalorder %s17, 0
      %p51 = por %p49, %p50
      %p52 = scmp.ne.s32.totalorder %s41, %s44
      %p53 = scmp.eq.s32.totalorder %s22, 1
      %p54 = por %p52, %p53
      %p55 = scmp.ne.s32.totalorder %s44, %s45
      %p56 = scmp.eq.s32.totalorder %s22, 0
      %p57 = por %p55, %p56
      %p58 = scmp.ne.s32.totalorder %s44, %s45
      %p59 = scmp.eq.s32.totalorder %s23, 1
      %p60 = por %p58, %p59
      %p62 = scmp.ne.s32.totalorder %s45, %s61
      %p63 = scmp.eq.s32.totalorder %s23, 0
      %p64 = por %p62, %p63
      %s65 = ssub.s32 %s24, %s36
      %s66 = ssub.s32 %s25, %s32
      %s67 = sor.u32 %s65, %s66
      %p68 = scmp.eq.s32.totalorder %s67, 0
      %s70 = sadd.s32 %s69, 1
      %s71 = scalar_select %p68, %s69, %s70
      %p74 = pneg %p68
      %p75 = scmp.eq.s32.totalorder %s17, 1
      %p76 = por %p74, %p75
      %p77 = scmp.ne.s32.totalorder %s69, %s72
      %p78 = scmp.eq.s32.totalorder %s17, 0
      %p79 = por %p77, %p78
      %p80 = scmp.ne.s32.totalorder %s69, %s72
      %p81 = scmp.eq.s32.totalorder %s22, 1
      %p82 = por %p80, %p81
      %p83 = scmp.ne.s32.totalorder %s72, %s73
      %p84 = scmp.eq.s32.totalorder %s22, 0
      %p85 = por %p83, %p84
      %p86 = scmp.ne.s32.totalorder %s72, %s73
      %p87 = scmp.eq.s32.totalorder %s23, 1
      %p88 = por %p86, %p87
      %p90 = scmp.ne.s32.totalorder %s73, %s89
      %p91 = scmp.eq.s32.totalorder %s23, 0
      %p92 = por %p90, %p91
      %s93 = ssub.s32 %s24, %s36
      %s94 = ssub.s32 %s25, %s32
      %s95 = sor.u32 %s93, %s94
      %p96 = scmp.eq.s32.totalorder %s95, 0
      %s98 = sadd.s32 %s97, 1
      %s99 = scalar_select %p96, %s97, %s98
      %p102 = pneg %p96
      %p103 = scmp.eq.s32.totalorder %s17, 1
      %p104 = por %p102, %p103
      %p105 = scmp.ne.s32.totalorder %s97, %s100
      %p106 = scmp.eq.s32.totalorder %s17, 0
      %p107 = por %p105, %p106
      %p108 = scmp.ne.s32.totalorder %s97, %s100
      %p109 = scmp.eq.s32.totalorder %s22, 1
      %p110 = por %p108, %p109
      %p111 = scmp.ne.s32.totalorder %s100, %s101
      %p112 = scmp.eq.s32.totalorder %s22, 0
      %p113 = por %p111, %p112
      %p114 = scmp.ne.s32.totalorder %s100, %s101
      %p115 = scmp.eq.s32.totalorder %s23, 1
      %p116 = por %p114, %p115
      %p118 = scmp.ne.s32.totalorder %s101, %s117
      %p119 = scmp.eq.s32.totalorder %s23, 0
      %p120 = por %p118, %p119
      %p121 = scmp.le.s32.totalorder 1, %s17
      %p122 = scmp.lt.s32.totalorder %s17, 3
      %p123 = pnand %p121, %p122
      %p124 = pneg %p123
      // Predicated region
      $region9: #{tpu_custom_call.1} parent=5 // pred_check
        _
      $region10: #{tpu_custom_call.1} parent=5 // pred_check_branch
        %126 = sbr.rel (%p123) target = $region12
      $region11: #{tpu_custom_call.1} parent=5 // pred_region
        %s127 = ssub.s32 %s17, 1
      $region12: #{tpu_custom_call.1} parent=5 // pred_fallthru
        _
      %p128 = scmp.lt.s32.totalorder %s17, 2
      // Predicated region
      $region13: #{tpu_custom_call.1} parent=5 // pred_check
        %p129 = pneg %p128
      $region14: #{tpu_custom_call.1} parent=5 // pred_check_branch
        %131 = sbr.rel (%p129) target = $region16
      $region15: #{tpu_custom_call.1} parent=5 // pred_region
        // Predicated region
        $region17: #{tpu_custom_call.1} parent=15 // pred_check
          %p132 = pneg %p51
        $region18: #{tpu_custom_call.1} parent=15 // pred_check_branch
          %134 = sbr.rel (%p132) target = $region20
        $region19: #{tpu_custom_call.1} parent=15 // pred_region
          %s135 = sand.u32 %s41, 1
          %s136 = scalar_lea.sflag [#allocation3], %s135
          %s137 = sand.u32 %s41, 1
          %s138 = smul.addr %s137, 32
          %s139 = scalar_lea.vmem [#allocation2], %s138
          %141 = vsyncadd %s136, 0
          %s142 = smul.addr %s24, 4
          %s143 = sadd.s32 %s25, %s142
          %s144 = smul.addr %s143, 8
          %s145 = scalar_lea.hbm %s0, %s144
          %s146 = sshll.u32 %s145, 4
          %s147 = int_to_ptr.hbm [resolvable:$true] %s146
          %s148 = sshll.u32 %s139, 4
          %s149 = int_to_ptr.vmem [resolvable:$true] %s148
          %154 = dma.hbm_to_vmem [thread:$0]  %s147, 512, %s149, %s136, 128, 128, 8
        $region20: #{tpu_custom_call.1} parent=15 // pred_fallthru
          _
        // Predicated region
        $region21: #{tpu_custom_call.1} parent=15 // pred_check
          %p155 = pneg %p79
        $region22: #{tpu_custom_call.1} parent=15 // pred_check_branch
          %157 = sbr.rel (%p155) target = $region24
        $region23: #{tpu_custom_call.1} parent=15 // pred_region
          %s158 = sand.u32 %s69, 1
          %s159 = scalar_lea.sflag [#allocation6], %s158
          %s160 = sand.u32 %s69, 1
          %s161 = smul.addr %s160, 2
          %s162 = scalar_lea.vmem [#allocation5], %s161
          %164 = vsyncadd %s159, 0
          %s165 = sadd.s32 %s25, %s24
          %s166 = smul.addr %s165, 2
          %s167 = scalar_lea.hbm %s1, %s166
          %s169 = sshll.u32 %s167, 4
          %s170 = int_to_ptr.hbm [resolvable:$true] %s169
          %s171 = sshll.u32 %s162, 4
          %s172 = int_to_ptr.vmem [resolvable:$true] %s171
          %174 = dma.hbm_to_vmem [thread:$0]  %s170, 32, %s172, %s159
        $region24: #{tpu_custom_call.1} parent=15 // pred_fallthru
          _
      $region16: #{tpu_custom_call.1} parent=5 // pred_fallthru
        _
      %p175 = scmp.le.s32.totalorder 1, %s17
      %p176 = scmp.lt.s32.totalorder %s17, 3
      %p177 = pnand %p175, %p176
      %p178 = pneg %p177
      // Predicated region
      $region25: #{tpu_custom_call.1} parent=5 // pred_check
        _
      $region26: #{tpu_custom_call.1} parent=5 // pred_check_branch
        %180 = sbr.rel (%p177) target = $region28
      $region27: #{tpu_custom_call.1} parent=5 // pred_region
        %s181 = ssub.s32 %s17, 1
        %s182 = sand.u32 %s44, 1
        %s183 = scalar_lea.sflag [#allocation3], %s182
        %s184 = sand.u32 %s44, 1
        %s185 = smul.addr %s184, 32
        %s186 = scalar_lea.vmem [#allocation2], %s185
        // Predicated region
        $region29: #{tpu_custom_call.1} parent=27 // pred_check
          %p187 = pneg %p57
        $region30: #{tpu_custom_call.1} parent=27 // pred_check_branch
          %189 = sbr.rel (%p187) target = $region32
        $region31: #{tpu_custom_call.1} parent=27 // pred_region
          %191 = dma.done %s183, 512
        $region32: #{tpu_custom_call.1} parent=27 // pred_fallthru
          _
        %s192 = sand.u32 %s72, 1
        %s193 = scalar_lea.sflag [#allocation6], %s192
        %s194 = sand.u32 %s72, 1
        %s195 = smul.addr %s194, 2
        %s196 = scalar_lea.vmem [#allocation5], %s195
        // Predicated region
        $region33: #{tpu_custom_call.1} parent=27 // pred_check
          %p197 = pneg %p85
        $region34: #{tpu_custom_call.1} parent=27 // pred_check_branch
          %199 = sbr.rel (%p197) target = $region36
        $region35: #{tpu_custom_call.1} parent=27 // pred_region
          %201 = dma.done %s193, 32
        $region36: #{tpu_custom_call.1} parent=27 // pred_fallthru
          _
        %s202 = sand.u32 %s44, 1
        %s203 = scalar_lea.sflag [#allocation3], %s202
        %s204 = sand.u32 %s44, 1
        %s205 = smul.addr %s204, 32
        %s206 = scalar_lea.vmem [#allocation2], %s205
        %p207 = pneg %p57
        %p208 = pneg %p54
        %s209 = sand.u32 %s72, 1
        %s210 = scalar_lea.sflag [#allocation6], %s209
        %s211 = sand.u32 %s72, 1
        %s212 = smul.addr %s211, 2
        %s213 = scalar_lea.vmem [#allocation5], %s212
        %p214 = pneg %p85
        %p215 = pneg %p82
        %p216 = pneg %p113
        %p217 = pneg %p110
        %s218 = sand.u32 %s100, 1
        %s219 = scalar_lea.sflag [#allocation4], %s218
        %s220 = sand.u32 %s100, 1
        %s221 = smul.addr %s220, 8
        %s222 = scalar_lea.vmem [#allocation7], %s221
        %v223 = vld [vmem:[%s186] sm:$0xff]
        %v224 = vld [vmem:[%s186 + $0x8] sm:$0xff]
        %v225 = vld [vmem:[%s186 + $0x10] sm:$0xff]
        %v226 = vld [vmem:[%s186 + $0x18] sm:$0xff]
        %v227 = vld [vmem:[%s196] sm:$0x3]
        %v228 = vunpack.c.0.s8 %v227
        %vm229 = vcmp.eq.s32.totalorder %v228, 0
        %vm230 = vcmp.eq.s32.totalorder %v228, 1
        %vm231 = vcmp.eq.s32.totalorder %v228, 2
        %vm232 = vcmp.eq.s32.totalorder %v228, 3
        %v233 = vsub.f32 1.0, %v223
        %v234 = vsub.f32 1.0, %v224
        %v235 = vsub.f32 1.0, %v225
        %v236 = vsub.f32 1.0, %v226
        %v237 = vsel %vm229, %v223, %v233
        %v238 = vsel %vm230, %v224, %v234
        %v239 = vsel %vm231, %v225, %v235
        %v240 = vsel %vm232, %v226, %v236
        %v241 = vlog2.pop %v237
        %v242 = vmul.f32 %v241, 0.6931472
        %v243 = vlog2.pop %v238
        %v244 = vmul.f32 %v243, 0.6931472
        %v245 = vlog2.pop %v239
        %v246 = vmul.f32 %v245, 0.6931472
        %v247 = vlog2.pop %v240
        %v248 = vmul.f32 %v247, 0.6931472
        %v249 = vmax.f32 %v242, -100.0
        %v250 = vmax.f32 %v244, -100.0
        %v251 = vmax.f32 %v246, -100.0
        %v252 = vmax.f32 %v248, -100.0
        %v253 = vadd.f32 %v249, %v250
        %v254 = vadd.f32 %v253, %v251
        %v255 = vadd.f32 %v254, %v252
        %256 = vadd.xlane.f32.xlu0 %v255
        %v257 = vpop.xlane.xlu0 %256
        %v258 = vrot.slane %v257, 4
        %v259 = vadd.f32 %v257, %v258
        %v260 = vrot.slane %v259, 2
        %v261 = vadd.f32 %v259, %v260
        %v262 = vrot.slane %v261, 1
        %v263 = vadd.f32 %v261, %v262
        %s264 = vtos %v263
        %v265 = vstv %s264
        %266 = vst [vmem:[%s222] sm:$0xff] %v265
        %s267 = sand.u32 %s100, 1
        %s268 = scalar_lea.sflag [#allocation4], %s267
        %s269 = sand.u32 %s100, 1
        %s270 = smul.addr %s269, 8
        %s271 = scalar_lea.vmem [#allocation7], %s270
        // Predicated region
        $region37: #{tpu_custom_call.1} parent=27 // pred_check
          %p272 = pneg %p110
        $region38: #{tpu_custom_call.1} parent=27 // pred_check_branch
          %274 = sbr.rel (%p272) target = $region40
        $region39: #{tpu_custom_call.1} parent=27 // pred_region
          %276 = vsyncadd %s268, 0
          %s277 = sadd.s32 %s27, %s26
          %s278 = smul.addr %s277, 8
          %s279 = scalar_lea.hbm %s2, %s278
          %s281 = sshll.u32 %s271, 4
          %s282 = int_to_ptr.vmem [resolvable:$true] %s281
          %s283 = sshll.u32 %s279, 4
          %s284 = int_to_ptr.hbm [resolvable:$true] %s283
          %286 = dma.vmem_to_hbm [thread:$0]  %s282, 128, %s284, %s268
        $region40: #{tpu_custom_call.1} parent=27 // pred_fallthru
          _
      $region28: #{tpu_custom_call.1} parent=5 // pred_fallthru
        _
      %p287 = scmp.le.s32.totalorder 2, %s17
      // Predicated region
      $region41: #{tpu_custom_call.1} parent=5 // pred_check
        %p288 = pneg %p287
      $region42: #{tpu_custom_call.1} parent=5 // pred_check_branch
        %290 = sbr.rel (%p288) target = $region44
      $region43: #{tpu_custom_call.1} parent=5 // pred_region
        %s291 = ssub.s32 %s17, 2
        // Predicated region
        $region45: #{tpu_custom_call.1} parent=43 // pred_check
          %p292 = pneg %p116
        $region46: #{tpu_custom_call.1} parent=43 // pred_check_branch
          %294 = sbr.rel (%p292) target = $region48
        $region47: #{tpu_custom_call.1} parent=43 // pred_region
          %s295 = sand.u32 %s101, 1
          %s296 = scalar_lea.sflag [#allocation4], %s295
          %s297 = sand.u32 %s101, 1
          %s298 = smul.addr %s297, 8
          %s299 = scalar_lea.vmem [#allocation7], %s298
          %301 = dma.done %s296, 128
        $region48: #{tpu_custom_call.1} parent=43 // pred_fallthru
          _
      $region44: #{tpu_custom_call.1} parent=5 // pred_fallthru
        _
    $region6: #{tpu_custom_call.1} parent=1 // loop_footer
      %s21 = sadd.s32 1, %s17
    $region7: #{tpu_custom_call.1} parent=1 // loop_footer_branch
      %16 = sbr.rel target = $region3
    $region8: #{tpu_custom_call.1} parent=1 // loop_exit
      _
    %302 = vsyncpa [#allocation3], 1
    %s303 = scalar_lea.sflag [#allocation3], 1
    %304 = vsyncpa %s303, 1
    %305 = vsyncpa [#allocation6], 1
    %s306 = scalar_lea.sflag [#allocation6], 1
    %307 = vsyncpa %s306, 1
    %308 = vsyncpa [#allocation4], 1
    %s309 = scalar_lea.sflag [#allocation4], 1
    %310 = vsyncpa %s309, 1

</llo_original>
